<compile_context>
chip_gen: v7x
topology: tpu7x:2x2x1
jax: 0.10.0
libtpu: 0.0.40
codegen_flags: <defaults>
</compile_context>

<pallas_src>
import functools
import math

import jax
import jax.numpy as jnp
from jax import lax
from jax.experimental import pallas as pl
from jax.experimental.pallas import tpu as pltpu


# ----------------------------------------------------------------------------
# small helpers
# ----------------------------------------------------------------------------
def _round_up(x, m):
    return ((x + m - 1) // m) * m


def _tile_for(dim, preferred, align):
    """Return (tile, padded_dim): the full dim for small sizes, an aligned
    divisor when one exists, otherwise pad up to the preferred tile."""
    if dim <= preferred:
        return dim, dim
    t = max((preferred // align) * align, align)
    cand = t
    while cand >= align:
        if dim % cand == 0:
            return cand, dim
        cand -= align
    return t, _round_up(dim, t)


def _vmem_limit_bytes():
    try:
        cap = int(pltpu.get_tpu_info().vmem_capacity_bytes)
    except Exception:
        cap = 64 * 1024 * 1024          # conservative (v7x-sized) fallback
    return max(32 * 1024 * 1024, min(int(cap * 0.85), 100 * 1024 * 1024))


def _pick_hb(H, dk, tq, tkv, in_itemsize, budget, use_mask):
    """Heads per grid step: largest legal divisor of H whose per-step VMEM
    footprint (double-buffered blocks + scratch + score temporaries) fits."""
    def legal(hb):
        return hb == H or (hb % 8 == 0 and (hb * dk) % 128 == 0)

    def footprint(hb):
        q_blk = tq * hb * dk * in_itemsize
        kv_blk = hb * tkv * dk * in_itemsize
        o_blk = tq * hb * dk * in_itemsize
        msk = tq * tkv if use_mask else 0
        scratch = hb * tq * (dk + 2) * 4 + hb * tq * dk * 2
        temps = 2 * hb * tq * tkv * 4
        return 2 * (q_blk + 2 * kv_blk + o_blk + msk) + scratch + temps

    cands = [d for d in range(H, 0, -1) if H % d == 0 and legal(d)]
    for hb in cands:
        if footprint(hb) <= budget:
            return hb
    return cands[-1]


# ----------------------------------------------------------------------------
# Kernel 1: tiled dense projection  y = x @ W + b   (w_q / w_k / w_v / w_o)
# ----------------------------------------------------------------------------
def _linear_kernel(x_ref, w_ref, b_ref, o_ref, acc_ref):
    kk = pl.program_id(2)

    @pl.when(kk == 0)
    def _():
        acc_ref[...] = jnp.zeros_like(acc_ref)

    acc_ref[...] += jnp.dot(x_ref[...], w_ref[...],
                            preferred_element_type=jnp.float32)

    @pl.when(kk == pl.num_programs(2) - 1)
    def _():
        o_ref[...] = (acc_ref[...] + b_ref[...].astype(jnp.float32)
                      ).astype(o_ref.dtype)


def linear(x, w, b, *, tm=512, tn=512, tk=512, compute_dtype=jnp.bfloat16,
           out_dtype=None):
    """x: (M, K), w: (K, N), b: (N,) -> x @ w + b.
    Tiled, pipelined GEMM; bf16 MXU operands, f32 accumulation."""
    out_dtype = out_dtype or x.dtype
    M, K = x.shape
    N = w.shape[1]
    tm, Mp = _tile_for(M, tm, 8)
    tk, Kp = _tile_for(K, tk, 128)
    tn, Np = _tile_for(N, tn, 128)

    xc = x.astype(compute_dtype)
    wc = w.astype(compute_dtype)
    bf = b.astype(jnp.float32).reshape(1, N)
    if Mp != M or Kp != K:
        xc = jnp.pad(xc, ((0, Mp - M), (0, Kp - K)))
    if Kp != K or Np != N:
        wc = jnp.pad(wc, ((0, Kp - K), (0, Np - N)))
    if Np != N:
        bf = jnp.pad(bf, ((0, 0), (0, Np - N)))

    out = pl.pallas_call(
        _linear_kernel,
        out_shape=jax.ShapeDtypeStruct((Mp, Np), out_dtype),
        grid_spec=pltpu.PrefetchScalarGridSpec(
            num_scalar_prefetch=0,
            grid=(Mp // tm, Np // tn, Kp // tk),
            in_specs=[
                pl.BlockSpec((tm, tk), lambda i, j, kk: (i, kk)),
                pl.BlockSpec((tk, tn), lambda i, j, kk: (kk, j)),
                pl.BlockSpec((1, tn), lambda i, j, kk: (0, j)),
            ],
            out_specs=pl.BlockSpec((tm, tn), lambda i, j, kk: (i, j)),
            scratch_shapes=[pltpu.VMEM((tm, tn), jnp.float32)]),
        compiler_params=pltpu.CompilerParams(
            dimension_semantics=("parallel", "parallel", "arbitrary"),
            vmem_limit_bytes=_vmem_limit_bytes()),
    )(xc, wc, bf)

    if Mp != M or Np != N:
        out = out[:M, :N]
    return out


# ----------------------------------------------------------------------------
# Kernel 2: flash-style scaled dot-product attention (online softmax)
#   grid = (batch, head-tile, q-tile, kv-tile)
#   q stays in (B, Sq, H, dk) layout; output is lane-dense (B, Sq, H*dk).
#   No score matrix is ever written to HBM.
# ----------------------------------------------------------------------------
def _flash_attn_kernel(*refs, causal, use_mask, mask_kv_pad, q_offset, sk,
                       compute_dtype):
    if use_mask:
        q_ref, k_ref, v_ref, mask_ref, o_ref, q_t, m_sc, l_sc, acc_sc = refs
    else:
        q_ref, k_ref, v_ref, o_ref, q_t, m_sc, l_sc, acc_sc = refs
        mask_ref = None

    hb, tkv, dk = k_ref.shape[1], k_ref.shape[2], k_ref.shape[3]
    tq = q_ref.shape[1]

    qi = pl.program_id(2)
    ki = pl.program_id(3)

    @pl.when(ki == 0)
    def _():
        m_sc[...] = jnp.full_like(m_sc, -jnp.inf)
        l_sc[...] = jnp.zeros_like(l_sc)
        acc_sc[...] = jnp.zeros_like(acc_sc)
        # Head-split the resident q tile once per q tile (no HBM transpose,
        # no per-kv-step relayout).  Static per-head slices.
        qv = q_ref[0]                                     # (tq, hb, dk)
        for h in range(hb):
            q_t[h] = qv[:, h, :].astype(compute_dtype)

    kv_start = ki * tkv
    q_start = q_offset + qi * tq

    def update():
        q = q_t[...]                                      # (hb, tq, dk) bf16
        k = k_ref[0].astype(compute_dtype)                # (hb, tkv, dk)
        v = v_ref[0].astype(compute_dtype)                # (hb, tkv, dk)

        # scores = q @ k^T per head (batched over hb), f32 MXU accumulation.
        s = lax.dot_general(q, k, (((2,), (2,)), ((0,), (0,))),
                            preferred_element_type=jnp.float32)  # (hb, tq, tkv)

        if causal:
            row = q_start + lax.broadcasted_iota(jnp.int32, (tq, tkv), 0)
            col = kv_start + lax.broadcasted_iota(jnp.int32, (tq, tkv), 1)
            keep = (col <= row) & (col < sk)
            s = jnp.where(keep[None, :, :], s, jnp.float32(-1e9))
        elif use_mask:
            keep = mask_ref[0] != 0                        # (tq, tkv) int8
            s = jnp.where(keep[None, :, :], s, jnp.float32(-1e9))
        elif mask_kv_pad:
            col = kv_start + lax.broadcasted_iota(jnp.int32, (tq, tkv), 1)
            s = jnp.where((col < sk)[None, :, :], s, jnp.float32(-1e9))

        m_prev = m_sc[...]
        m_new = jnp.maximum(m_prev, jnp.max(s, axis=-1, keepdims=True))
        alpha = jnp.exp(m_prev - m_new)
        p = jnp.exp(s - m_new)                             # (hb, tq, tkv) f32
        l_sc[...] = alpha * l_sc[...] + jnp.sum(p, axis=-1, keepdims=True)
        acc_sc[...] = alpha * acc_sc[...] + lax.dot_general(
            p.astype(compute_dtype), v, (((2,), (1,)), ((0,), (0,))),
            preferred_element_type=jnp.float32)            # (hb, tq, dk)
        m_sc[...] = m_new

    if causal:
        # Skip kv tiles entirely above the causal diagonal (first tile always
        # runs so the accumulators get defined values).
        pl.when((kv_start <= q_start + tq - 1) | (ki == 0))(update)
    else:
        update()

    @pl.when(ki == pl.num_programs(3) - 1)
    def _():
        inv_l = pl.reciprocal(l_sc[...], approx=True)       # (hb, tq, 1)
        # Lane-dense store: (tq, hb*dk) slab, per-head static slices.
        for h in range(hb):
            o_ref[0, :, h * dk:(h + 1) * dk] = (
                acc_sc[h] * inv_l[h]).astype(o_ref.dtype)


def attention(q, k, v, mask=None, *, causal=False, tq=256, tkv=512,
              compute_dtype=jnp.bfloat16):
    """q: (B, Sq, H, dk); k, v: (B, H, Sk, dk).
    mask: broadcastable to (B, 1, Sq, Sk) with 0 = masked, or causal=True for
    an in-kernel causal mask.  Returns the merged-head context (B, Sq, H*dk)."""
    B, Sq, H, dk = q.shape
    Sk = k.shape[2]
    d_model = H * dk

    tq, Sq_p = _tile_for(Sq, tq, 32)     # NOTE: on v5e tq=128 is MXU-matched
    tkv, Sk_p = _tile_for(Sk, tkv, 128)

    q_in = jnp.pad(q, ((0, 0), (0, Sq_p - Sq), (0, 0), (0, 0))) if Sq_p != Sq else q
    if Sk_p != Sk:
        k_in = jnp.pad(k, ((0, 0), (0, 0), (0, Sk_p - Sk), (0, 0)))
        v_in = jnp.pad(v, ((0, 0), (0, 0), (0, Sk_p - Sk), (0, 0)))
    else:
        k_in, v_in = k, v

    use_mask = (mask is not None) and (not causal)
    vmem_limit = _vmem_limit_bytes()
    hb = _pick_hb(H, dk, tq, tkv, q.dtype.itemsize,
                  budget=int(vmem_limit * 0.7), use_mask=use_mask)

    inputs = [q_in, k_in, v_in]
    in_specs = [
        pl.BlockSpec((1, tq, hb, dk), lambda b, hi, qi, ki: (b, qi, hi, 0)),
        pl.BlockSpec((1, hb, tkv, dk), lambda b, hi, qi, ki: (b, hi, ki, 0)),
        pl.BlockSpec((1, hb, tkv, dk), lambda b, hi, qi, ki: (b, hi, ki, 0)),
    ]
    if use_mask:
        m = jnp.asarray(mask)
        while m.ndim < 4:
            m = m[None]
        if m.shape[1] != 1:
            # TODO(synk): per-head masks (B, H, Sq, Sk) are not supported.
            raise NotImplementedError("mask must be broadcastable to (B, 1, Sq, Sk)")
        m = jnp.broadcast_to(m, (B, 1, Sq, Sk)).reshape(B, Sq, Sk)
        m_i8 = (m != 0).astype(jnp.int8)
        if Sq_p != Sq or Sk_p != Sk:
            m_i8 = jnp.pad(m_i8, ((0, 0), (0, Sq_p - Sq), (0, Sk_p - Sk)))
        inputs.append(m_i8)
        in_specs.append(
            pl.BlockSpec((1, tq, tkv), lambda b, hi, qi, ki: (b, qi, ki)))

    kernel = functools.partial(
        _flash_attn_kernel, causal=causal, use_mask=use_mask,
        mask_kv_pad=(Sk_p != Sk), q_offset=Sk - Sq, sk=Sk,
        compute_dtype=compute_dtype)

    grid = (B, H // hb, Sq_p // tq, Sk_p // tkv)
    out = pl.pallas_call(
        kernel,
        out_shape=jax.ShapeDtypeStruct((B, Sq_p, d_model), q.dtype),
        grid_spec=pltpu.PrefetchScalarGridSpec(
            num_scalar_prefetch=0,
            grid=grid,
            in_specs=in_specs,
            out_specs=pl.BlockSpec((1, tq, hb * dk),
                                   lambda b, hi, qi, ki: (b, qi, hi)),
            scratch_shapes=[
                pltpu.VMEM((hb, tq, dk), compute_dtype),   # head-split q tile
                pltpu.VMEM((hb, tq, 1), jnp.float32),      # running max
                pltpu.VMEM((hb, tq, 1), jnp.float32),      # running denominator
                pltpu.VMEM((hb, tq, dk), jnp.float32),     # output accumulator
            ]),
        compiler_params=pltpu.CompilerParams(
            dimension_semantics=("parallel", "parallel", "parallel", "arbitrary"),
            vmem_limit_bytes=vmem_limit),
    )(*inputs)

    if Sq_p != Sq:
        out = out[:, :Sq, :]
    return out


# ----------------------------------------------------------------------------
# Module wrapper (head split / kv-cache concat stay in plain JAX)
# ----------------------------------------------------------------------------
def init_mha_params(key, d_model):
    """Deterministic nn.Linear-style init: U(-1/sqrt(in), 1/sqrt(in))."""
    bound = 1.0 / math.sqrt(d_model)
    keys = jax.random.split(key, 8)

    def lin(kw, kb):
        w = jax.random.uniform(kw, (d_model, d_model), jnp.float32, -bound, bound)
        b = jax.random.uniform(kb, (d_model,), jnp.float32, -bound, bound)
        return w, b

    return {
        "w_q": lin(keys[0], keys[1]),
        "w_k": lin(keys[2], keys[3]),
        "w_v": lin(keys[4], keys[5]),
        "w_o": lin(keys[6], keys[7]),
    }


def prepare_mha_params(params, head, compute_dtype=jnp.bfloat16):
    """One-time derivation of kernel-friendly params (hoisted out of forward):
    1/sqrt(d_k) folded into w_q/b_q, GEMM weights cast to bf16, fused QKV
    weight pre-concatenated for the self-attention path."""
    wq, bq = params["w_q"]
    wk, bk = params["w_k"]
    wv, bv = params["w_v"]
    wo, bo = params["w_o"]
    d_model = wq.shape[0]
    scale = 1.0 / math.sqrt(d_model // head)

    wq_s = (wq * scale).astype(compute_dtype)
    bq_s = (bq * scale).astype(jnp.float32)
    wk_c = wk.astype(compute_dtype)
    wv_c = wv.astype(compute_dtype)
    wo_c = wo.astype(compute_dtype)

    w_qkv = jnp.concatenate([wq_s, wk_c, wv_c], axis=1)
    b_qkv = jnp.concatenate([bq_s, bk, bv], axis=0).astype(jnp.float32)

    return {
        "head": head,
        "w_q": (wq_s, bq_s),
        "w_k": (wk_c, bk.astype(jnp.float32)),
        "w_v": (wv_c, bv.astype(jnp.float32)),
        "w_o": (wo_c, bo.astype(jnp.float32)),
        "w_qkv": (w_qkv, b_qkv),
    }


def multihead_attention(pp, q, k, v, mask=None, cache_kv=None, *, causal=False):
    """q, k, v: (B, S, d_model).  Returns (output (B, Sq, d_model),
    (present_key, present_value) each (B, H, Sk, d_k))."""
    head = pp["head"]
    B, Sq, d_model = q.shape
    Sk_in = k.shape[1]
    d_k = d_model // head

    if q is k and k is v:
        # Self-attention: single fused QKV GEMM (activations read once).
        w_qkv, b_qkv = pp["w_qkv"]
        qkv = linear(q.reshape(B * Sq, d_model), w_qkv, b_qkv)
        query = qkv[:, 0 * d_model:1 * d_model]
        key_p = qkv[:, 1 * d_model:2 * d_model]
        value = qkv[:, 2 * d_model:3 * d_model]
    else:
        query = linear(q.reshape(B * Sq, d_model), *pp["w_q"])
        key_p = linear(k.reshape(B * Sk_in, d_model), *pp["w_k"])
        value = linear(v.reshape(B * Sk_in, d_model), *pp["w_v"])

    # Query stays in (B, Sq, H, d_k) layout (free reshape, no HBM transpose).
    query = query.reshape(B, Sq, head, d_k)
    # K/V keep the (B, H, Sk, d_k) layout required by the kv-cache.
    key_p = key_p.reshape(B, Sk_in, head, d_k).transpose(0, 2, 1, 3)
    value = value.reshape(B, Sk_in, head, d_k).transpose(0, 2, 1, 3)

    if cache_kv is not None:
        past_key, past_value = cache_kv
        key_p = jnp.concatenate((past_key, key_p), axis=2)
        value = jnp.concatenate((past_value, value), axis=2)
    present_kv = (key_p, value)

    # TODO(synk): train-mode dropout on attention probabilities not implemented
    # (nn.Dropout in eval mode is the identity, which is what is computed here).
    ctx = attention(query, key_p, value, mask=mask, causal=causal)  # (B, Sq, d_model)

    out = linear(ctx.reshape(B * Sq, d_model), *pp["w_o"]).reshape(B, Sq, d_model)
    return out, present_kv


# ----------------------------------------------------------------------------
# Pure-JAX reference for numerical validation
# ----------------------------------------------------------------------------
def _mha_reference(params, q, k, v, mask, head, cache_kv=None):
    B, Sq, d_model = q.shape
    d_k = d_model // head

    def lin(x, wb):
        w, b = wb
        return x @ w + b

    query = lin(q, params["w_q"]).reshape(B, Sq, head, d_k).transpose(0, 2, 1, 3)
    key_p = lin(k, params["w_k"]).reshape(B, -1, head, d_k).transpose(0, 2, 1, 3)
    value = lin(v, params["w_v"]).reshape(B, -1, head, d_k).transpose(0, 2, 1, 3)
    if cache_kv is not None:
        pk, pv = cache_kv
        key_p = jnp.concatenate((pk, key_p), axis=2)
        value = jnp.concatenate((pv, value), axis=2)
    scores = jnp.einsum("bhqd,bhkd->bhqk", query, key_p) / math.sqrt(d_k)
    if mask is not None:
        scores = jnp.where(mask == 0, -1e9, scores)
    attn = jax.nn.softmax(scores, axis=-1)
    ctx = jnp.einsum("bhqk,bhkd->bhqd", attn, value)
    ctx = ctx.transpose(0, 2, 1, 3).reshape(B, Sq, d_model)
    return lin(ctx, params["w_o"]), (key_p, value)


# ----------------------------------------------------------------------------
if __name__ == "__main__":
    d_model, head = 32, 4
    B, S = 2, 8

    root = jax.random.PRNGKey(0)
    k_params, k_q, k_k, k_v, k_d = jax.random.split(root, 5)

    raw_params = init_mha_params(k_params, d_model)
    pp = prepare_mha_params(raw_params, head)   # hoisted out of the forward path

    q = jax.random.normal(k_q, (B, S, d_model), jnp.float32)
    k = jax.random.normal(k_k, (B, S, d_model), jnp.float32)
    v = jax.random.normal(k_v, (B, S, d_model), jnp.float32)

    causal_mask = jnp.tril(jnp.ones((S, S), jnp.float32))
    mask = jnp.broadcast_to(causal_mask[None, None, :, :], (B, 1, S, S))

    # 1) cross-attention style call: explicit (streamed int8) mask path.
    out_x, (pk, pv) = multihead_attention(pp, q, k, v, mask=mask)
    # 2) self-attention: fused QKV GEMM + in-kernel causal mask (no HBM mask).
    out_self, (pk_s, pv_s) = multihead_attention(pp, q, q, q, causal=True)
    # 3) decode step with a kv-cache (Sq=1), no mask.
    q_new = jax.random.normal(k_d, (B, 1, d_model), jnp.float32)
    out_dec, (pk_d, pv_d) = multihead_attention(pp, q_new, q_new, q_new,
                                                cache_kv=(pk_s, pv_s))
    jax.block_until_ready((out_x, out_self, out_dec, pk, pv, pk_d, pv_d))

    ref_x, (rk, rv) = _mha_reference(raw_params, q, k, v, mask, head)
    ref_self, _ = _mha_reference(raw_params, q, q, q, mask, head)
    ref_dec, (rk_d, rv_d) = _mha_reference(raw_params, q_new, q_new, q_new,
                                           None, head, cache_kv=(pk_s, pv_s))

    assert out_x.shape == (B, S, d_model)
    assert pk.shape == (B, head, S, d_model // head)
    assert pv.shape == (B, head, S, d_model // head)
    assert pk_d.shape == (B, head, S + 1, d_model // head)
    assert out_dec.shape == (B, 1, d_model)
    assert jnp.allclose(pk, rk, atol=2e-2, rtol=2e-2)
    assert jnp.allclose(pv, rv, atol=2e-2, rtol=2e-2)
    assert jnp.allclose(pk_d, rk_d, atol=2e-2, rtol=2e-2)
    assert jnp.allclose(out_x, ref_x, atol=5e-2, rtol=5e-2)
    assert jnp.allclose(out_self, ref_self, atol=5e-2, rtol=5e-2)
    assert jnp.allclose(out_dec, ref_dec, atol=5e-2, rtol=5e-2)
    print("KERNEL_OK")
</pallas_src>

<mosaic_0001>
module attributes {stable_mosaic.version = 11 : i64} {
  func.func @_linear_kernel(%arg0: i32, %arg1: i32, %arg2: i32, %arg3: memref<16x32xbf16, #tpu.memory_space<vmem>>, %arg4: memref<32x32xbf16, #tpu.memory_space<vmem>>, %arg5: memref<1x32xf32, #tpu.memory_space<vmem>>, %arg6: memref<16x32xf32, #tpu.memory_space<vmem>>, %arg7: memref<16x32xf32, #tpu.memory_space<vmem>>) attributes {dimension_semantics = [#tpu.dimension_semantics<parallel>, #tpu.dimension_semantics<parallel>, #tpu.dimension_semantics<arbitrary>], iteration_bounds = array<i64: 1, 1, 1>, scalar_prefetch = 0 : i64, scratch_operands = 1 : i64, tpu.core_type = #tpu.core_type<tc>, window_params = [{transform_indices = @transform_0, window_bounds = array<i64: 16, 32>}, {transform_indices = @transform_1, window_bounds = array<i64: 32, 32>}, {transform_indices = @transform_2, window_bounds = array<i64: 1, 32>}, {transform_indices = @transform_3, window_bounds = array<i64: 16, 32>}]} {
    %c0_i32 = arith.constant 0 : i32
    %0 = arith.cmpi eq, %arg2, %c0_i32 : i32
    %1 = arith.extui %0 : i1 to i32
    %c0_i32_0 = arith.constant 0 : i32
    %2 = arith.cmpi ne, %1, %c0_i32_0 : i32
    scf.if %2 {
      %cst_10 = arith.constant 0.000000e+00 : f32
      %12 = vector.broadcast %cst_10 : f32 to vector<16x32xf32>
      %c0_11 = arith.constant 0 : index
      %c0_12 = arith.constant 0 : index
      %13 = vector.load %arg7[%c0_11, %c0_12] : memref<16x32xf32, #tpu.memory_space<vmem>>, vector<16x32xf32>
      tpu.vector_store %arg7[%c0_11, %c0_12], %12 {strides = array<i32>} : memref<16x32xf32, #tpu.memory_space<vmem>>, vector<16x32xf32>,
    } else {
    }
    %c0 = arith.constant 0 : index
    %c0_1 = arith.constant 0 : index
    %3 = vector.load %arg7[%c0, %c0_1] : memref<16x32xf32, #tpu.memory_space<vmem>>, vector<16x32xf32>
    %c0_2 = arith.constant 0 : index
    %c0_3 = arith.constant 0 : index
    %4 = vector.load %arg3[%c0_2, %c0_3] : memref<16x32xbf16, #tpu.memory_space<vmem>>, vector<16x32xbf16>
    %c0_4 = arith.constant 0 : index
    %c0_5 = arith.constant 0 : index
    %5 = vector.load %arg4[%c0_4, %c0_5] : memref<32x32xbf16, #tpu.memory_space<vmem>>, vector<32x32xbf16>
    %cst = arith.constant dense<0.000000e+00> : vector<16x32xf32>
    %6 = tpu.matmul %4, %5, %cst {dimension_numbers = #tpu.dot_dimension_numbers<[1], [0], [0], [1], [0, 0, 1, 1], [], []>} : vector<16x32xbf16>, vector<32x32xbf16>, vector<16x32xf32> -> vector<16x32xf32>
    %7 = arith.addf %3, %6 : vector<16x32xf32>
    %c0_6 = arith.constant 0 : index
    %c0_7 = arith.constant 0 : index
    %8 = vector.load %arg7[%c0_6, %c0_7] : memref<16x32xf32, #tpu.memory_space<vmem>>, vector<16x32xf32>
    tpu.vector_store %arg7[%c0_6, %c0_7], %7 {strides = array<i32>} : memref<16x32xf32, #tpu.memory_space<vmem>>, vector<16x32xf32>,
    %c0_i32_8 = arith.constant 0 : i32
    %9 = arith.cmpi eq, %arg2, %c0_i32_8 : i32
    %10 = arith.extui %9 : i1 to i32
    %c0_i32_9 = arith.constant 0 : i32
    %11 = arith.cmpi ne, %10, %c0_i32_9 : i32
    scf.if %11 {
      %c0_10 = arith.constant 0 : index
      %c0_11 = arith.constant 0 : index
      %12 = vector.load %arg7[%c0_10, %c0_11] : memref<16x32xf32, #tpu.memory_space<vmem>>, vector<16x32xf32>
      %c0_12 = arith.constant 0 : index
      %c0_13 = arith.constant 0 : index
      %13 = vector.load %arg5[%c0_12, %c0_13] : memref<1x32xf32, #tpu.memory_space<vmem>>, vector<1x32xf32>
      %14 = vector.broadcast %13 : vector<1x32xf32> to vector<16x32xf32>
      %15 = arith.addf %12, %14 : vector<16x32xf32>
      %c0_14 = arith.constant 0 : index
      %c0_15 = arith.constant 0 : index
      %16 = vector.load %arg6[%c0_14, %c0_15] : memref<16x32xf32, #tpu.memory_space<vmem>>, vector<16x32xf32>
      tpu.vector_store %arg6[%c0_14, %c0_15], %15 {strides = array<i32>} : memref<16x32xf32, #tpu.memory_space<vmem>>, vector<16x32xf32>,
    } else {
    }
    return
  }
  func.func @transform_0(%arg0: i32, %arg1: i32, %arg2: i32) -> (i32, i32) {
    %c0_i32 = arith.constant 0 : i32
    return %arg0, %arg2 : i32, i32
  }
  func.func @transform_1(%arg0: i32, %arg1: i32, %arg2: i32) -> (i32, i32) {
    %c0_i32 = arith.constant 0 : i32
    return %arg2, %arg1 : i32, i32
  }
  func.func @transform_2(%arg0: i32, %arg1: i32, %arg2: i32) -> (i32, i32) {
    %c0_i32 = arith.constant 0 : i32
    %c0_i32_0 = arith.constant 0 : i32
    return %c0_i32, %arg1 : i32, i32
  }
  func.func @transform_3(%arg0: i32, %arg1: i32, %arg2: i32) -> (i32, i32) {
    %c0_i32 = arith.constant 0 : i32
    return %arg0, %arg1 : i32, i32
  }
}

</mosaic_0001>

<llo_original>
// kernel: tpu_custom_call.1
$region0: #{tpu_custom_call.1}
  #allocation0 [shape = 'u32[]', space=smem, size = 0x4, offset = 0x4, fixed_abs, tag = 'smem constant byte address 0x4 - core index']
  #allocation1 [shape = 'u32[144,128]{1,0:T(1,128)}', space=vmem, size = 0x12000, scoped, tag = 'internal scratch']
  #allocation2 [shape = 'f32[16,32]{1,0:T(8,128)}', space=vmem, size = 0x2000, scoped, tag = 'scratch operand']
  %s0 = inlined_call_operand.hbm [shape: bf16[16,32], index: 0, kind: input, shape index: {}]
  %s1 = inlined_call_operand.hbm [shape: bf16[32,32], index: 1, kind: input, shape index: {}]
  %s2 = inlined_call_operand.vmem [shape: f32[1,32], index: 2, kind: input, shape index: {}]
  %s3 = inlined_call_operand.hbm [shape: f32[16,32], index: 3, kind: output, shape index: {}]
  %s4 = sld [smem:[#allocation0]]
  $region38: #{tpu_custom_call.1} parent=0
    _
  %s6 = ssub.s32 1, %s4
  %s7 = scalar_select 0, %s6, %s4
  $region1: #{tpu_custom_call.1} parent=0
    #allocation3 [shape = 'u8[4096]{0}', space=vmem, size = 0x1000, scoped, tag = 'input window, operand 0, single buffered']
    #allocation4 [shape = 's32[1]{0}', space=sflag, size = 0x4, scoped, tag = 'scoped memory for tpu_custom_call.1']
    #allocation5 [shape = 's32[1]{0}', space=sflag, size = 0x4, scoped, tag = 'scoped memory for tpu_custom_call.1']
    #allocation6 [shape = 'u8[8192]{0}', space=vmem, size = 0x2000, scoped, tag = 'input window, operand 1, single buffered']
    #allocation7 [shape = 's32[1]{0}', space=sflag, size = 0x4, scoped, tag = 'scoped memory for tpu_custom_call.1']
    #allocation8 [shape = 'u8[8192]{0}', space=vmem, size = 0x2000, scoped, tag = 'output window, operand 0, single buffered']
    %8 = vsyncpa [#allocation4], 0
    %9 = vsyncpa [#allocation7], 0
    %10 = vsyncpa [#allocation5], 0
    // Predicated region
    $region2: #{tpu_custom_call.1} parent=1 // pred_check
      _
    $region3: #{tpu_custom_call.1} parent=1 // pred_check_branch
      %12 = sbr.rel (0) target = $region5
    $region4: #{tpu_custom_call.1} parent=1 // pred_region
      %s14 = ssub.s32 128, 128
      %15 = vsyncadd [#allocation4], %s14
      %s16 = sshll.u32 [#allocation3], 4
      %s17 = int_to_ptr.vmem [resolvable:$true] %s16
      %22 = dma.hbm_to_vmem [thread:$0]  %s0, 128, %s17, [#allocation4], 64, 64, 4
    $region5: #{tpu_custom_call.1} parent=1 // pred_fallthru
      _
    // Predicated region
    $region6: #{tpu_custom_call.1} parent=1 // pred_check
      _
    $region7: #{tpu_custom_call.1} parent=1 // pred_check_branch
      %24 = sbr.rel (0) target = $region9
    $region8: #{tpu_custom_call.1} parent=1 // pred_region
      %s26 = ssub.s32 256, 256
      %27 = vsyncadd [#allocation7], %s26
      %s28 = sshll.u32 [#allocation6], 4
      %s29 = int_to_ptr.vmem [resolvable:$true] %s28
      %34 = dma.hbm_to_vmem [thread:$0]  %s1, 256, %s29, [#allocation7], 64, 64, 4
    $region9: #{tpu_custom_call.1} parent=1 // pred_fallthru
      _
    // Predicated region
    $region10: #{tpu_custom_call.1} parent=1 // pred_check
      _
    $region11: #{tpu_custom_call.1} parent=1 // pred_check_branch
      %36 = sbr.rel (0) target = $region13
    $region12: #{tpu_custom_call.1} parent=1 // pred_region
      _
    $region13: #{tpu_custom_call.1} parent=1 // pred_fallthru
      _
    // Predicated region
    $region14: #{tpu_custom_call.1} parent=1 // pred_check
      _
    $region15: #{tpu_custom_call.1} parent=1 // pred_check_branch
      %38 = sbr.rel (0) target = $region17
    $region16: #{tpu_custom_call.1} parent=1 // pred_region
      %39 = dma.done [#allocation4], 128
    $region17: #{tpu_custom_call.1} parent=1 // pred_fallthru
      _
    // Predicated region
    $region18: #{tpu_custom_call.1} parent=1 // pred_check
      _
    $region19: #{tpu_custom_call.1} parent=1 // pred_check_branch
      %41 = sbr.rel (0) target = $region21
    $region20: #{tpu_custom_call.1} parent=1 // pred_region
      %42 = dma.done [#allocation7], 256
    $region21: #{tpu_custom_call.1} parent=1 // pred_fallthru
      _
    %p44 = scmp.eq.s32.totalorder 0, 0
    // Predicated region
    $region22: #{tpu_custom_call.1} parent=1 // pred_check
      %p45 = pneg %p44
    $region23: #{tpu_custom_call.1} parent=1 // pred_check_branch
      %47 = sbr.rel (%p45) target = $region25
    $region24: #{tpu_custom_call.1} parent=1 // pred_region
      %vm48 = vcmask 261120
      %49 = vst.msk [vmem:[#allocation2] sm:$0xff] %vm48, 0.0
      %50 = vst.msk [vmem:[#allocation2 + $0x8] sm:$0xff] %vm48, 0.0
    $region25: #{tpu_custom_call.1} parent=1 // pred_fallthru
      _
    %v51 = vld [vmem:[#allocation2] sm:$0xff]
    %v52 = vld [vmem:[#allocation2 + $0x8] sm:$0xff]
    %v53 = vld [vmem:[#allocation3] sm:$0xf]
    %v54 = vld [vmem:[#allocation3 + $0x4] sm:$0xf]
    %v55 = vld [vmem:[#allocation6] sm:$0xf]
    %v56 = vld [vmem:[#allocation6 + $0x4] sm:$0xf]
    %v57 = vld [vmem:[#allocation6 + $0x8] sm:$0xf]
    %v58 = vld [vmem:[#allocation6 + $0xc] sm:$0xf]
    %v61 = vunpack.c.l.b16 %v53
    %v62 = vunpack.c.l.b16 %v54
    %v63 = vpack.c.b16 %v62, %v61
    %v68 = vunpack.c.l.b16 %v55
    %v69 = vunpack.c.l.b16 %v56
    %v70 = vunpack.c.l.b16 %v57
    %v71 = vunpack.c.l.b16 %v58
    %v72 = vpack.c.b16 %v69, %v68
    %v73 = vpack.c.b16 %v71, %v70
    %vm76 = vcmask 261120
    %v78 = vsel %vm76, %v63, 0
    %80 = vmatprep.subr.bf16.mxu0 0
    %81 = vmatpush1.bf16.msra.mxu0 %v72
    %82 = vmatprep.subr.bf16.mxu0 0
    %83 = vmatpush1.bf16.msra.mxu0 %v73
    %84 = vmatprep.subr.bf16.mxu0 0
    %85 = vmatpush1.bf16.msra.mxu0 0
    %86 = vmatprep.subr.bf16.mxu0 0
    %87 = vmatpush1.bf16.msra.mxu0 0
    %88 = vmatprep.subr.bf16.mxu0 0
    %89 = vmatpush1.bf16.msra.mxu0 0
    %90 = vmatprep.subr.bf16.mxu0 0
    %91 = vmatpush1.bf16.msra.mxu0 0
    %92 = vmatprep.subr.bf16.mxu0 0
    %93 = vmatpush1.bf16.msra.mxu0 0
    %94 = vmatprep.subr.bf16.mxu0 0
    %95 = vmatpush1.bf16.msra.mxu0 0
    %96 = vmatprep.subr.bf16.mxu0 0
    %97 = vmatpush1.bf16.msra.mxu0 0
    %98 = vmatprep.subr.bf16.mxu0 0
    %99 = vmatpush1.bf16.msra.mxu0 0
    %100 = vmatprep.subr.bf16.mxu0 0
    %101 = vmatpush1.bf16.msra.mxu0 0
    %102 = vmatprep.subr.bf16.mxu0 0
    %103 = vmatpush1.bf16.msra.mxu0 0
    %104 = vmatprep.subr.bf16.mxu0 0
    %105 = vmatpush1.bf16.msra.mxu0 0
    %106 = vmatprep.subr.bf16.mxu0 0
    %107 = vmatpush1.bf16.msra.mxu0 0
    %108 = vmatprep.subr.bf16.mxu0 0
    %109 = vmatpush1.bf16.msra.mxu0 0
    %110 = vmatprep.subr.bf16.mxu0 0
    %111 = vmatpush1.bf16.msra.mxu0 0
    %112 = vmatprep.mubr.bf16.mxu0 0
    %113 = vmatmul.mubr.bf16.gmra.mrb[0].mxu0 %v78
    %v114 = vpop.f32.mrb[0].mxu0
    %v115 = vadd.f32 0.0, %v114
    %v116 = vpop.f32.mrb[0].mxu0
    %v117 = vpop.f32.mrb[0].mxu0
    %v118 = vadd.f32 0.0, %v117
    %v119 = vpop.f32.mrb[0].mxu0
    %120 = vdwg.mxu0
    %v121 = vadd.f32 %v51, %v115
    %v122 = vadd.f32 %v52, %v118
    %123 = vst.msk [vmem:[#allocation2] sm:$0xff] %vm76, %v121
    %124 = vst.msk [vmem:[#allocation2 + $0x8] sm:$0xff] %vm76, %v122
    // Predicated region
    $region26: #{tpu_custom_call.1} parent=1 // pred_check
      %p125 = pneg %p44
    $region27: #{tpu_custom_call.1} parent=1 // pred_check_branch
      %127 = sbr.rel (%p125) target = $region29
    $region28: #{tpu_custom_call.1} parent=1 // pred_region
      %v128 = vld [vmem:[#allocation2] sm:$0xff]
      %v129 = vld [vmem:[#allocation2 + $0x8] sm:$0xff]
      %v130 = vld [vmem:[%s2] sm:$0x1]
      %v132 = vlaneseq
      %v133 = vshrl.u32 %v132, 7
      %v134 = vsub.s32 0, %v133
      %v135 = vrot.slane %v130, %v134
      %v137 = vadd.f32 %v128, %v135
      %v138 = vadd.f32 %v129, %v135
      %139 = vst.msk [vmem:[#allocation8] sm:$0xff] %vm76, %v137
      %140 = vst.msk [vmem:[#allocation8 + $0x8] sm:$0xff] %vm76, %v138
    $region29: #{tpu_custom_call.1} parent=1 // pred_fallthru
      _
    // Predicated region
    $region30: #{tpu_custom_call.1} parent=1 // pred_check
      _
    $region31: #{tpu_custom_call.1} parent=1 // pred_check_branch
      %142 = sbr.rel (0) target = $region33
    $region32: #{tpu_custom_call.1} parent=1 // pred_region
      %s144 = ssub.s32 256, 256
      %145 = vsyncadd [#allocation5], %s144
      %s146 = sshll.u32 [#allocation8], 4
      %s147 = int_to_ptr.vmem [resolvable:$true] %s146
      %152 = dma.vmem_to_hbm [thread:$0]  %s147, 256, %s3, [#allocation5], 128, 128, 8
    $region33: #{tpu_custom_call.1} parent=1 // pred_fallthru
      _
    // Predicated region
    $region34: #{tpu_custom_call.1} parent=1 // pred_check
      _
    $region35: #{tpu_custom_call.1} parent=1 // pred_check_branch
      %154 = sbr.rel (0) target = $region37
    $region36: #{tpu_custom_call.1} parent=1 // pred_region
      %155 = dma.done [#allocation5], 256
    $region37: #{tpu_custom_call.1} parent=1 // pred_fallthru
      _
    %156 = vsyncpa [#allocation4], 1
    %157 = vsyncpa [#allocation7], 1
    %158 = vsyncpa [#allocation5], 1

</llo_original>
